<compile_context>
chip_gen: v7x
topology: tpu7x:2x2x1
jax: 0.10.0
libtpu: 0.0.40
codegen_flags: <defaults>
</compile_context>

<pallas_src>
import math

import jax
import jax.numpy as jnp
from jax.experimental import pallas as pl
from jax.experimental.pallas import tpu as pltpu

_SQRT_2_OVER_PI = math.sqrt(2.0 / math.pi)


def _gelu_kernel(x_ref, o_ref):
    # One lane-dense (row_block, lanes) tile per grid step.
    xf = x_ref[...].astype(jnp.float32)
    inner = _SQRT_2_OVER_PI * (xf + 0.044715 * (xf * xf * xf))
    y = 0.5 * xf * (1.0 + jnp.tanh(inner))  # tanh -> EUP slot
    o_ref[...] = y.astype(o_ref.dtype)


def _gelu_2d(slab):
    """Run the GELU kernel over a 2-D (rows, lanes) slab, preserving dtype."""
    rows, lanes = slab.shape
    dtype = slab.dtype
    itemsize = dtype.itemsize
    # Sublane packing: 8 rows/vreg for 32-bit, 16 for 16-bit, 32 for 8-bit.
    sublane = max(8, 32 // itemsize)
    # ~1M elements (~4 MiB of f32 math) per grid step.
    target_elems = 1 << 20

    if rows <= sublane:
        row_block = rows  # block == full array dim -> always a legal block
    else:
        rb = min(rows, max(1, target_elems // lanes))
        rb = max(sublane, (rb // sublane) * sublane)
        # Keep at least 2 grid steps so v7x can shard across both TensorCores.
        half = pl.cdiv(pl.cdiv(rows, 2), sublane) * sublane
        rb = min(rb, half)
        row_block = rows if rb >= rows else rb

    grid = (pl.cdiv(rows, row_block),)

    tile_in_bytes = row_block * lanes * itemsize
    tile_f32_bytes = row_block * lanes * 4
    # Budget: input + output double-buffered, plus headroom for in-kernel f32
    # temporaries.  Cap at 64 MiB (v7x physical VMEM) and floor at 16 MiB.
    vmem_limit = int(min(64 << 20,
                         max(16 << 20, 4 * tile_in_bytes + 4 * tile_f32_bytes)))

    return pl.pallas_call(
        _gelu_kernel,
        out_shape=jax.ShapeDtypeStruct((rows, lanes), dtype),
        grid_spec=pltpu.PrefetchScalarGridSpec(
            num_scalar_prefetch=0,
            grid=grid,
            in_specs=[pl.BlockSpec((row_block, lanes), lambda i: (i, 0))],
            out_specs=pl.BlockSpec((row_block, lanes), lambda i: (i, 0)),
        ),
        compiler_params=pltpu.CompilerParams(
            dimension_semantics=("parallel",),
            vmem_limit_bytes=vmem_limit,
        ),
    )(slab)


def gelu(x):
    """Tanh-approximation GELU, numerically matching the PyTorch module."""
    orig_shape = x.shape
    n = x.size
    if n == 0:
        return x

    # Fast path: last dim already lane-dense (multiple of 128).  Collapse the
    # leading dims into rows and feed the array directly -- no pad, no slice,
    # no extra HBM passes.
    if x.ndim >= 2 and x.shape[-1] % 128 == 0 and x.shape[-1] <= 32768:
        lanes = x.shape[-1]
        slab = x.reshape(n // lanes, lanes)
        return _gelu_2d(slab).reshape(orig_shape)

    # General path: flatten and pick the widest lane count that divides n
    # (no padding needed in that case).  Padding + tail slice only happens
    # when n is not a multiple of 128; zero padding is numerically safe
    # (gelu(0) == 0) and the padded tail is discarded.
    lanes = 128
    for cand in (2048, 1024, 512, 256, 128):
        if n % cand == 0:
            lanes = cand
            break
    rows = pl.cdiv(n, lanes)
    padded = rows * lanes
    flat = x.reshape(-1)
    if padded != n:
        flat = jnp.pad(flat, (0, padded - n))
    out = _gelu_2d(flat.reshape(rows, lanes))
    if padded != n:
        return out.reshape(-1)[:n].reshape(orig_shape)
    return out.reshape(orig_shape)


def _reference(x):
    xf = x.astype(jnp.float32)
    y = 0.5 * xf * (1.0 + jnp.tanh(_SQRT_2_OVER_PI * (xf + 0.044715 * xf ** 3)))
    return y.astype(x.dtype)


if __name__ == "__main__":
    root = jax.random.PRNGKey(0)
    k0, k1, k2 = jax.random.split(root, 3)

    # 1) Shape from the chapter's usage (batch=2, seq=8, hidden=32): general path.
    x0 = jax.random.normal(k0, (2, 8, 32), jnp.float32)
    o0 = jax.block_until_ready(gelu(x0))
    assert o0.shape == x0.shape
    assert jnp.allclose(o0, _reference(x0), atol=1e-6, rtol=1e-6), "f32 mismatch"

    # 2) Lane-dense fast path (hidden multiple of 128), multi-step parallel grid.
    x1 = jax.random.normal(k1, (4, 16, 128), jnp.float32)
    o1 = jax.block_until_ready(gelu(x1))
    assert o1.shape == x1.shape
    assert jnp.allclose(o1, _reference(x1), atol=1e-6, rtol=1e-6), "fast-path mismatch"

    # 3) bf16 input (16-row sublane packing), fast path.
    x2 = jax.random.normal(k2, (2, 16, 256), jnp.float32).astype(jnp.bfloat16)
    o2 = jax.block_until_ready(gelu(x2))
    assert o2.shape == x2.shape
    assert jnp.allclose(o2.astype(jnp.float32), _reference(x2).astype(jnp.float32),
                        atol=2e-2, rtol=2e-2), "bf16 mismatch"

    print("KERNEL_OK")
</pallas_src>

<mosaic_0001>
module attributes {stable_mosaic.version = 11 : i64} {
  func.func @_gelu_kernel(%arg0: i32, %arg1: memref<1x512xf32, #tpu.memory_space<vmem>>, %arg2: memref<1x512xf32, #tpu.memory_space<vmem>>) attributes {dimension_semantics = [#tpu.dimension_semantics<parallel>], iteration_bounds = array<i64: 1>, scalar_prefetch = 0 : i64, scratch_operands = 0 : i64, tpu.core_type = #tpu.core_type<tc>, window_params = [{transform_indices = @transform_0, window_bounds = array<i64: 1, 512>}, {transform_indices = @transform_1, window_bounds = array<i64: 1, 512>}]} {
    %c0 = arith.constant 0 : index
    %c0_0 = arith.constant 0 : index
    %0 = vector.load %arg1[%c0, %c0_0] : memref<1x512xf32, #tpu.memory_space<vmem>>, vector<1x512xf32>
    %1 = arith.mulf %0, %0 : vector<1x512xf32>
    %2 = arith.mulf %1, %0 : vector<1x512xf32>
    %cst = arith.constant 4.471500e-02 : f32
    %3 = vector.broadcast %cst : f32 to vector<1x512xf32>
    %4 = arith.mulf %3, %2 : vector<1x512xf32>
    %5 = arith.addf %0, %4 : vector<1x512xf32>
    %cst_1 = arith.constant 0.797884583 : f32
    %6 = vector.broadcast %cst_1 : f32 to vector<1x512xf32>
    %7 = arith.mulf %6, %5 : vector<1x512xf32>
    %cst_2 = arith.constant 5.000000e-01 : f32
    %8 = vector.broadcast %cst_2 : f32 to vector<1x512xf32>
    %9 = arith.mulf %8, %0 : vector<1x512xf32>
    %10 = math.tanh %7 : vector<1x512xf32>
    %cst_3 = arith.constant 1.000000e+00 : f32
    %11 = vector.broadcast %cst_3 : f32 to vector<1x512xf32>
    %12 = arith.addf %11, %10 : vector<1x512xf32>
    %13 = arith.mulf %9, %12 : vector<1x512xf32>
    %c0_4 = arith.constant 0 : index
    %c0_5 = arith.constant 0 : index
    %14 = vector.load %arg2[%c0_4, %c0_5] : memref<1x512xf32, #tpu.memory_space<vmem>>, vector<1x512xf32>
    tpu.vector_store %arg2[%c0_4, %c0_5], %13 {strides = array<i32>} : memref<1x512xf32, #tpu.memory_space<vmem>>, vector<1x512xf32>,
    return
  }
  func.func @transform_0(%arg0: i32) -> (i32, i32) {
    %c0_i32 = arith.constant 0 : i32
    %c0_i32_0 = arith.constant 0 : i32
    return %arg0, %c0_i32 : i32, i32
  }
  func.func @transform_1(%arg0: i32) -> (i32, i32) {
    %c0_i32 = arith.constant 0 : i32
    %c0_i32_0 = arith.constant 0 : i32
    return %arg0, %c0_i32 : i32, i32
  }
}

</mosaic_0001>

<llo_original>
// kernel: tpu_custom_call.1
$region0: #{tpu_custom_call.1}
  #allocation0 [shape = 'u32[]', space=smem, size = 0x4, offset = 0x4, fixed_abs, tag = 'smem constant byte address 0x4 - core index']
  #allocation1 [shape = 'u32[144,128]{1,0:T(1,128)}', space=vmem, size = 0x12000, scoped, tag = 'internal scratch']
  %s0 = inlined_call_operand.hbm [shape: f32[1,512], index: 0, kind: input, shape index: {}]
  %s1 = inlined_call_operand.hbm [shape: f32[1,512], index: 1, kind: output, shape index: {}]
  %s2 = sld [smem:[#allocation0]]
  $region18: #{tpu_custom_call.1} parent=0
    _
  %s4 = ssub.s32 1, %s2
  %s5 = scalar_select 0, %s4, %s2
  $region1: #{tpu_custom_call.1} parent=0
    #allocation2 [shape = 'u8[2048]{0}', space=vmem, size = 0x800, scoped, tag = 'input window, operand 0, single buffered']
    #allocation3 [shape = 's32[1]{0}', space=sflag, size = 0x4, scoped, tag = 'scoped memory for tpu_custom_call.1']
    #allocation4 [shape = 's32[1]{0}', space=sflag, size = 0x4, scoped, tag = 'scoped memory for tpu_custom_call.1']
    #allocation5 [shape = 'u8[2048]{0}', space=vmem, size = 0x800, scoped, tag = 'output window, operand 0, single buffered']
    %6 = vsyncpa [#allocation3], 0
    %7 = vsyncpa [#allocation4], 0
    // Predicated region
    $region2: #{tpu_custom_call.1} parent=1 // pred_check
      _
    $region3: #{tpu_custom_call.1} parent=1 // pred_check_branch
      %9 = sbr.rel (0) target = $region5
    $region4: #{tpu_custom_call.1} parent=1 // pred_region
      %s11 = ssub.s32 64, 64
      %12 = vsyncadd [#allocation3], %s11
      %s14 = sshll.u32 [#allocation2], 4
      %s15 = int_to_ptr.vmem [resolvable:$true] %s14
      %17 = dma.hbm_to_vmem [thread:$0]  %s0, 64, %s15, [#allocation3]
    $region5: #{tpu_custom_call.1} parent=1 // pred_fallthru
      _
    // Predicated region
    $region6: #{tpu_custom_call.1} parent=1 // pred_check
      _
    $region7: #{tpu_custom_call.1} parent=1 // pred_check_branch
      %19 = sbr.rel (0) target = $region9
    $region8: #{tpu_custom_call.1} parent=1 // pred_region
      %20 = dma.done [#allocation3], 64
    $region9: #{tpu_custom_call.1} parent=1 // pred_fallthru
      _
    %v21 = vld [vmem:[#allocation2] sm:$0xf]
    %v22 = vmul.f32 %v21, %v21
    %v23 = vmul.f32 %v22, %v21
    %v24 = vmul.f32 %v23, 0.044715
    %v25 = vadd.f32 %v21, %v24
    %v26 = vmul.f32 %v25, 0.7978846
    %v27 = vmul.f32 %v21, 0.5
    %v28 = vtanh.pop %v26
    %v29 = vadd.f32 %v28, 1.0
    %v30 = vmul.f32 %v27, %v29
    %v31 = vlaneseq
    %vm32 = vcmp.ge.s32.totalorder %v31, 0
    %vm33 = vcmp.lt.s32.totalorder %v31, 512
    %vm34 = vmand %vm32, %vm33
    %35 = vst.msk [vmem:[#allocation5] sm:$0xf] %vm34, %v30
    // Predicated region
    $region10: #{tpu_custom_call.1} parent=1 // pred_check
      _
    $region11: #{tpu_custom_call.1} parent=1 // pred_check_branch
      %37 = sbr.rel (0) target = $region13
    $region12: #{tpu_custom_call.1} parent=1 // pred_region
      %s39 = ssub.s32 64, 64
      %40 = vsyncadd [#allocation4], %s39
      %s42 = sshll.u32 [#allocation5], 4
      %s43 = int_to_ptr.vmem [resolvable:$true] %s42
      %45 = dma.vmem_to_hbm [thread:$0]  %s43, 64, %s1, [#allocation4]
    $region13: #{tpu_custom_call.1} parent=1 // pred_fallthru
      _
    // Predicated region
    $region14: #{tpu_custom_call.1} parent=1 // pred_check
      _
    $region15: #{tpu_custom_call.1} parent=1 // pred_check_branch
      %47 = sbr.rel (0) target = $region17
    $region16: #{tpu_custom_call.1} parent=1 // pred_region
      %48 = dma.done [#allocation4], 64
    $region17: #{tpu_custom_call.1} parent=1 // pred_fallthru
      _
    %49 = vsyncpa [#allocation3], 1
    %50 = vsyncpa [#allocation4], 1

</llo_original>
